<compile_context>
chip_gen: v6e
topology: v6e:2x2x1
jax: 0.10.0
libtpu: 0.0.40
codegen_flags: <defaults>
</compile_context>

<pallas_src>
import functools

import jax
import jax.numpy as jnp
import numpy as np
from jax import lax
from jax.experimental import pallas as pl
from jax.experimental.pallas import tpu as pltpu

_LANE = 128                      # rays per lane-block (vreg lane width)
_MAX_SUBBLOCKS = 512             # lane-blocks per grid step (65 536 rays)
_TARGET_STEPS = 8                # >= 4 steps per TensorCore on v7x megacore
_FUSED_GATHER_MAX_CAMERAS = 32   # in-kernel select-gather threshold
_VMEM_LIMIT_BYTES = 32 * 1024 * 1024


def _cdiv(a, b):
    return -(-a // b)


def _tile_plan(n_rays):
    """Pick (lane-blocks per grid step, padded lane-block count)."""
    nb = _cdiv(n_rays, _LANE)
    if nb <= 8:
        # Tiny problem: one grid step covering the whole sublane-block axis.
        return nb, nb
    # Aim for ~_TARGET_STEPS grid steps (writeback/prefetch overlap, both v7x
    # TCs busy), capped at _MAX_SUBBLOCKS to amortise the ~0.35 us per-step
    # pipeline overhead; keep the block a multiple of 8 for (8, 128) tiling.
    sub = min(_MAX_SUBBLOCKS, _cdiv(_cdiv(nb, _TARGET_STEPS), 8) * 8)
    nb_pad = _cdiv(nb, sub) * sub
    return sub, nb_pad


def _exp_planes(tx, ty, tz, wx, wy, wz):
    """exp_map_SO3xR3 on (S, 128) component planes -> 12 output planes.

    Returned planes are the row-major flattened 3x4 matrix [R | t]:
        [R00, R01, R02, tx, R10, R11, R12, ty, R20, R21, R22, tz]
    """
    wxx = wx * wx
    wyy = wy * wy
    wzz = wz * wz
    nrms = wxx + wyy + wzz
    nrms_c = jnp.maximum(nrms, 1e-4)          # torch.clamp(nrms, min=1e-4)
    inv = lax.rsqrt(nrms_c)                   # 1/theta on the EUP
    theta = nrms_c * inv                      # sqrt(clamped nrms)
    fac1 = inv * jnp.sin(theta)
    fac2 = (inv * inv) * (1.0 - jnp.cos(theta))

    f1x = fac1 * wx
    f1y = fac1 * wy
    f1z = fac1 * wz
    f2x = fac2 * wx
    fxy = f2x * wy
    fxz = f2x * wz
    fyz = fac2 * wy * wz
    d = 1.0 - fac2 * nrms                     # shared diagonal term

    # R = I + fac1*skew(w) + fac2*(w w^T - |w|^2 I)
    return (d + fac2 * wxx, fxy - f1z, fxz + f1y, tx,
            fxy + f1z, d + fac2 * wyy, fyz - f1x, ty,
            fxz - f1y, fyz + f1x, d + fac2 * wzz, tz)


def _so3xr3_planes_kernel(tv_ref, mat_ref):
    """Staging-layout path: tv_ref is a (6, S, 128) tile of tangent planes."""
    planes = _exp_planes(tv_ref[0, :, :], tv_ref[1, :, :], tv_ref[2, :, :],
                         tv_ref[3, :, :], tv_ref[4, :, :], tv_ref[5, :, :])
    for r in range(12):
        mat_ref[r, :, :] = planes[r]


def _so3xr3_gather_kernel(num_cameras, params_ref, idx_ref, mat_ref):
    """Fused-gather path.

    params_ref: (num_cameras * 6,) f32, resident in SMEM (flat row-major).
    idx_ref:    (S, 128) int32 ray -> camera indices (padded rays are 0).
    mat_ref:    (12, S, 128) f32 output planes.
    """
    idx = idx_ref[...]
    zeros = jnp.zeros(idx.shape, jnp.float32)
    # Initialise with camera 0 (also covers padded rays), then one unrolled
    # compare + 6 selects per remaining camera (cheap vs. the 52 B/ray HBM
    # budget for num_cameras <= _FUSED_GATHER_MAX_CAMERAS).
    comp = [zeros + params_ref[c] for c in range(6)]
    for cam in range(1, num_cameras):
        mask = idx == cam
        for c in range(6):
            comp[c] = jnp.where(mask, params_ref[cam * 6 + c], comp[c])

    planes = _exp_planes(*comp)
    for r in range(12):
        mat_ref[r, :, :] = planes[r]


@jax.jit
def _camera_correction(params, indices):
    """Fused gather + exp_map_SO3xR3.

    params:  (num_cameras, 6) float32 pose adjustments.
    indices: (N,) int ray -> camera indices.
    returns: (N, 3, 4) float32 correction matrices.
    """
    params = params.astype(jnp.float32)
    indices = indices.astype(jnp.int32)
    n = indices.shape[0]
    num_cameras = params.shape[0]

    sub, nb_pad = _tile_plan(n)
    n_pad = nb_pad * _LANE
    grid = (nb_pad // sub,)

    # Pad ray->camera indices with 0 (padded rays use camera 0's finite
    # params; their outputs are sliced off below).
    idx = jnp.zeros((n_pad,), jnp.int32).at[:n].set(indices)
    idx2d = idx.reshape(nb_pad, _LANE)

    out_shape = jax.ShapeDtypeStruct((12, nb_pad, _LANE), jnp.float32)
    out_spec = pl.BlockSpec((12, sub, _LANE), lambda i: (0, i, 0))
    cparams = pltpu.CompilerParams(
        dimension_semantics=("parallel",),
        vmem_limit_bytes=_VMEM_LIMIT_BYTES,
    )

    if num_cameras <= _FUSED_GATHER_MAX_CAMERAS:
        # Gather fused into the kernel: only 4 B/ray of indices cross HBM on
        # the input side; the tiny params table lives in SMEM for the whole
        # call (no 24 B/ray staging array written + re-read).
        out = pl.pallas_call(
            functools.partial(_so3xr3_gather_kernel, num_cameras),
            out_shape=out_shape,
            grid_spec=pltpu.PrefetchScalarGridSpec(
                num_scalar_prefetch=0,
                grid=grid,
                in_specs=[
                    pl.BlockSpec(memory_space=pltpu.MemorySpace.SMEM),
                    pl.BlockSpec((sub, _LANE), lambda i: (i, 0)),
                ],
                out_specs=out_spec,
            ),
            compiler_params=cparams,
        )(params.reshape(-1), idx2d)
    else:
        # Large camera counts: one XLA gather writes the lane-dense
        # (6, NB, 128) staging layout directly, kernel stays pure elementwise.
        tv = jnp.take(params.T, idx2d, axis=1)
        out = pl.pallas_call(
            _so3xr3_planes_kernel,
            out_shape=out_shape,
            grid_spec=pltpu.PrefetchScalarGridSpec(
                num_scalar_prefetch=0,
                grid=grid,
                in_specs=[pl.BlockSpec((6, sub, _LANE), lambda i: (0, i, 0))],
                out_specs=out_spec,
            ),
            compiler_params=cparams,
        )(tv)

    # (12, NB, 128) -> (N, 3, 4): single XLA transpose to honor the PyTorch
    # (num_rays, 3, 4) output contract (skip it downstream if possible).
    return jnp.transpose(out, (1, 2, 0)).reshape(n_pad, 3, 4)[:n]


def exp_map_so3xr3(tangent):
    """(N, 6) tangent vectors -> (N, 3, 4) matrices (identity-gather wrapper)."""
    tangent = jnp.asarray(tangent, jnp.float32)
    n = tangent.shape[0]
    return _camera_correction(tangent, jnp.arange(n, dtype=jnp.int32))


def _exp_map_so3xr3_ref(tangent):
    """Pure-JAX reference (mirrors the PyTorch exp_map_SO3xR3)."""
    t = tangent[:, :3]
    w = tangent[:, 3:]
    nrms = jnp.sum(w * w, axis=1)
    theta = jnp.sqrt(jnp.maximum(nrms, 1e-4))
    inv = 1.0 / theta
    fac1 = (inv * jnp.sin(theta))[:, None, None]
    fac2 = (inv * inv * (1.0 - jnp.cos(theta)))[:, None, None]
    zeros = jnp.zeros_like(w[:, 0])
    skew = jnp.stack(
        [
            jnp.stack([zeros, -w[:, 2], w[:, 1]], axis=-1),
            jnp.stack([w[:, 2], zeros, -w[:, 0]], axis=-1),
            jnp.stack([-w[:, 1], w[:, 0], zeros], axis=-1),
        ],
        axis=1,
    )
    skew2 = jnp.einsum("nij,njk->nik", skew, skew)
    rot = fac1 * skew + fac2 * skew2 + jnp.eye(3, dtype=tangent.dtype)[None]
    return jnp.concatenate([rot, t[:, :, None]], axis=-1)


class CameraOptimizer:
    """JAX/Pallas port of the PyTorch CameraOptimizer forward pass."""

    def __init__(self, mode, num_cameras, modalities_to_optimize,
                 shared_optimization=False, key=None):
        assert mode in ("off", "SO3xR3", "SE3")
        if mode == "SE3":
            # TODO(synk): SE3 exponential map (full screw motion) not ported.
            raise NotImplementedError("SE3 mode not implemented in this port.")
        self.mode = mode
        self.num_cameras = num_cameras
        self.modalities_to_optimize = dict(modalities_to_optimize)
        self.shared_optimization = shared_optimization
        self.pose_adjustment = {}
        if mode == "SO3xR3":
            key = jax.random.PRNGKey(0) if key is None else key
            for i, mod in enumerate(self.modalities_to_optimize):
                shape = (1, 6) if shared_optimization else (num_cameras, 6)
                # PyTorch init is zeros; add a small deterministic perturbation
                # so the kernel computes something non-trivial.
                self.pose_adjustment[mod] = 0.1 * jax.random.normal(
                    jax.random.fold_in(key, i), shape, dtype=jnp.float32
                )

    def forward(self, camera_indices):
        outputs = {}
        mods = [m for m, idx in camera_indices.items() if idx is not None]
        if self.mode == "off":
            eye = jnp.eye(4, dtype=jnp.float32)[None, :3, :4]
            for m in mods:
                outputs[m] = jnp.tile(eye, (camera_indices[m].shape[0], 1, 1))
            return outputs

        # Batch every modality into ONE kernel call: concatenate parameter
        # tables along the camera axis and offset each modality's indices.
        tables, idx_list, counts = [], [], []
        offset = 0
        for m in mods:
            p = self.pose_adjustment[m].astype(jnp.float32)
            ray_idx = camera_indices[m][:, 0].astype(jnp.int32)
            if self.shared_optimization:
                ray_idx = jnp.zeros_like(ray_idx)   # single-row table
            tables.append(p)
            idx_list.append(ray_idx + offset)
            counts.append(int(ray_idx.shape[0]))
            offset += p.shape[0]

        all_params = jnp.concatenate(tables, axis=0)
        all_idx = jnp.concatenate(idx_list, axis=0)
        mats = _camera_correction(all_params, all_idx)

        start = 0
        for m, cnt in zip(mods, counts):
            mat = mats[start:start + cnt]
            start += cnt
            if not self.modalities_to_optimize[m]:
                mat = jax.lax.stop_gradient(mat)
            outputs[m] = mat
        return outputs

    def forward_single_modality(self, camera_indices, modality):
        indices = camera_indices[modality]
        idx = jnp.broadcast_to(indices.reshape(-1, 1), (indices.shape[0], 3))
        return self.forward({modality: idx})[modality]

    def set_num_cameras(self, num_cameras):
        self.num_cameras = num_cameras


if __name__ == "__main__":
    num_cameras = 5
    num_rays = 8
    key = jax.random.PRNGKey(0)
    k_idx, k_idx2, k_param, k_big, k_many = jax.random.split(key, 5)

    opt = CameraOptimizer(
        mode="SO3xR3",
        num_cameras=num_cameras,
        modalities_to_optimize={"rgb": True, "depth": False},
        shared_optimization=False,
        key=k_param,
    )

    camera_indices = {
        "rgb": jax.random.randint(k_idx, (num_rays, 3), 0, num_cameras, dtype=jnp.int32),
        "depth": jax.random.randint(k_idx2, (num_rays, 3), 0, num_cameras, dtype=jnp.int32),
    }

    # Both modalities are batched into a single pallas_call (fused-gather path).
    outputs = opt.forward(camera_indices)
    outputs = jax.tree_util.tree_map(jax.block_until_ready, outputs)

    ok = True
    for mod, idx in camera_indices.items():
        ref = _exp_map_so3xr3_ref(jnp.take(opt.pose_adjustment[mod], idx[:, 0], axis=0))
        ok &= np.allclose(np.asarray(outputs[mod]), np.asarray(ref), atol=5e-5, rtol=1e-5)
        ok &= outputs[mod].shape == (num_rays, 3, 4)

    # Multi-step grid + padding path (N not a multiple of 128, grid >= 2).
    big_idx = jax.random.randint(k_big, (1500, 3), 0, num_cameras, dtype=jnp.int32)
    big = jax.block_until_ready(opt.forward({"rgb": big_idx})["rgb"])
    big_ref = _exp_map_so3xr3_ref(jnp.take(opt.pose_adjustment["rgb"], big_idx[:, 0], axis=0))
    ok &= np.allclose(np.asarray(big), np.asarray(big_ref), atol=5e-5, rtol=1e-5)
    ok &= big.shape == (1500, 3, 4)

    # Large camera count -> XLA-gather fallback kernel path.
    many_cams = 100
    many_opt = CameraOptimizer("SO3xR3", many_cams, {"rgb": True}, key=k_param)
    many_idx = jax.random.randint(k_many, (700, 3), 0, many_cams, dtype=jnp.int32)
    many = jax.block_until_ready(many_opt.forward({"rgb": many_idx})["rgb"])
    many_ref = _exp_map_so3xr3_ref(
        jnp.take(many_opt.pose_adjustment["rgb"], many_idx[:, 0], axis=0))
    ok &= np.allclose(np.asarray(many), np.asarray(many_ref), atol=5e-5, rtol=1e-5)

    # Shared-optimization path (single-row table, fused gather with C=1).
    shared_opt = CameraOptimizer("SO3xR3", num_cameras, {"rgb": True},
                                 shared_optimization=True, key=k_param)
    sh = jax.block_until_ready(shared_opt.forward({"rgb": camera_indices["rgb"]})["rgb"])
    sh_ref = _exp_map_so3xr3_ref(
        jnp.broadcast_to(shared_opt.pose_adjustment["rgb"], (num_rays, 6)))
    ok &= np.allclose(np.asarray(sh), np.asarray(sh_ref), atol=5e-5, rtol=1e-5)

    # 'off' mode (identity tiles) and single-modality glue path.
    off_opt = CameraOptimizer("off", num_cameras, {"rgb": True})
    off_out = jax.block_until_ready(off_opt.forward({"rgb": camera_indices["rgb"]}))
    ok &= np.allclose(
        np.asarray(off_out["rgb"]),
        np.tile(np.eye(4, dtype=np.float32)[None, :3, :4], (num_rays, 1, 1)),
    )
    single = jax.block_until_ready(
        opt.forward_single_modality({"rgb": camera_indices["rgb"][:, 0]}, "rgb")
    )
    ok &= single.shape == (num_rays, 3, 4)

    if ok:
        print("KERNEL_OK")
    else:
        raise SystemExit("mismatch vs reference")
</pallas_src>

<mosaic_0001>
module attributes {stable_mosaic.version = 11 : i64} {
  func.func @_so3xr3_gather_kernel(%arg0: i32, %arg1: memref<60xf32, #tpu.memory_space<smem>>, %arg2: memref<1x128xi32, #tpu.memory_space<vmem>>, %arg3: memref<12x1x128xf32, #tpu.memory_space<vmem>>) attributes {dimension_semantics = [#tpu.dimension_semantics<parallel>], iteration_bounds = array<i64: 1>, scalar_prefetch = 0 : i64, scratch_operands = 0 : i64, tpu.core_type = #tpu.core_type<tc>, window_params = [{transform_indices = @transform_0, window_bounds = array<i64: 60>}, {transform_indices = @transform_1, window_bounds = array<i64: 1, 128>}, {transform_indices = @transform_2, window_bounds = array<i64: 12, 1, 128>}]} {
    %c0 = arith.constant 0 : index
    %c0_0 = arith.constant 0 : index
    %0 = vector.load %arg2[%c0, %c0_0] : memref<1x128xi32, #tpu.memory_space<vmem>>, vector<1x128xi32>
    %cst = arith.constant 0.000000e+00 : f32
    %1 = vector.broadcast %cst : f32 to vector<1x128xf32>
    %c0_1 = arith.constant 0 : index
    %2 = memref.load %arg1[%c0_1] : memref<60xf32, #tpu.memory_space<smem>>
    %3 = vector.broadcast %2 : f32 to vector<1x128xf32>
    %4 = arith.addf %1, %3 : vector<1x128xf32>
    %c1 = arith.constant 1 : index
    %5 = memref.load %arg1[%c1] : memref<60xf32, #tpu.memory_space<smem>>
    %6 = vector.broadcast %5 : f32 to vector<1x128xf32>
    %7 = arith.addf %1, %6 : vector<1x128xf32>
    %c2 = arith.constant 2 : index
    %8 = memref.load %arg1[%c2] : memref<60xf32, #tpu.memory_space<smem>>
    %9 = vector.broadcast %8 : f32 to vector<1x128xf32>
    %10 = arith.addf %1, %9 : vector<1x128xf32>
    %c3 = arith.constant 3 : index
    %11 = memref.load %arg1[%c3] : memref<60xf32, #tpu.memory_space<smem>>
    %12 = vector.broadcast %11 : f32 to vector<1x128xf32>
    %13 = arith.addf %1, %12 : vector<1x128xf32>
    %c4 = arith.constant 4 : index
    %14 = memref.load %arg1[%c4] : memref<60xf32, #tpu.memory_space<smem>>
    %15 = vector.broadcast %14 : f32 to vector<1x128xf32>
    %16 = arith.addf %1, %15 : vector<1x128xf32>
    %c5 = arith.constant 5 : index
    %17 = memref.load %arg1[%c5] : memref<60xf32, #tpu.memory_space<smem>>
    %18 = vector.broadcast %17 : f32 to vector<1x128xf32>
    %19 = arith.addf %1, %18 : vector<1x128xf32>
    %c1_i32 = arith.constant 1 : i32
    %20 = vector.broadcast %c1_i32 : i32 to vector<1x128xi32>
    %21 = arith.cmpi eq, %0, %20 : vector<1x128xi32>
    %c6 = arith.constant 6 : index
    %22 = memref.load %arg1[%c6] : memref<60xf32, #tpu.memory_space<smem>>
    %23 = vector.broadcast %22 : f32 to vector<1x128xf32>
    %24 = arith.select %21, %23, %4 : vector<1x128xi1>, vector<1x128xf32>
    %c7 = arith.constant 7 : index
    %25 = memref.load %arg1[%c7] : memref<60xf32, #tpu.memory_space<smem>>
    %26 = vector.broadcast %25 : f32 to vector<1x128xf32>
    %27 = arith.select %21, %26, %7 : vector<1x128xi1>, vector<1x128xf32>
    %c8 = arith.constant 8 : index
    %28 = memref.load %arg1[%c8] : memref<60xf32, #tpu.memory_space<smem>>
    %29 = vector.broadcast %28 : f32 to vector<1x128xf32>
    %30 = arith.select %21, %29, %10 : vector<1x128xi1>, vector<1x128xf32>
    %c9 = arith.constant 9 : index
    %31 = memref.load %arg1[%c9] : memref<60xf32, #tpu.memory_space<smem>>
    %32 = vector.broadcast %31 : f32 to vector<1x128xf32>
    %33 = arith.select %21, %32, %13 : vector<1x128xi1>, vector<1x128xf32>
    %c10 = arith.constant 10 : index
    %34 = memref.load %arg1[%c10] : memref<60xf32, #tpu.memory_space<smem>>
    %35 = vector.broadcast %34 : f32 to vector<1x128xf32>
    %36 = arith.select %21, %35, %16 : vector<1x128xi1>, vector<1x128xf32>
    %c11 = arith.constant 11 : index
    %37 = memref.load %arg1[%c11] : memref<60xf32, #tpu.memory_space<smem>>
    %38 = vector.broadcast %37 : f32 to vector<1x128xf32>
    %39 = arith.select %21, %38, %19 : vector<1x128xi1>, vector<1x128xf32>
    %c2_i32 = arith.constant 2 : i32
    %40 = vector.broadcast %c2_i32 : i32 to vector<1x128xi32>
    %41 = arith.cmpi eq, %0, %40 : vector<1x128xi32>
    %c12 = arith.constant 12 : index
    %42 = memref.load %arg1[%c12] : memref<60xf32, #tpu.memory_space<smem>>
    %43 = vector.broadcast %42 : f32 to vector<1x128xf32>
    %44 = arith.select %41, %43, %24 : vector<1x128xi1>, vector<1x128xf32>
    %c13 = arith.constant 13 : index
    %45 = memref.load %arg1[%c13] : memref<60xf32, #tpu.memory_space<smem>>
    %46 = vector.broadcast %45 : f32 to vector<1x128xf32>
    %47 = arith.select %41, %46, %27 : vector<1x128xi1>, vector<1x128xf32>
    %c14 = arith.constant 14 : index
    %48 = memref.load %arg1[%c14] : memref<60xf32, #tpu.memory_space<smem>>
    %49 = vector.broadcast %48 : f32 to vector<1x128xf32>
    %50 = arith.select %41, %49, %30 : vector<1x128xi1>, vector<1x128xf32>
    %c15 = arith.constant 15 : index
    %51 = memref.load %arg1[%c15] : memref<60xf32, #tpu.memory_space<smem>>
    %52 = vector.broadcast %51 : f32 to vector<1x128xf32>
    %53 = arith.select %41, %52, %33 : vector<1x128xi1>, vector<1x128xf32>
    %c16 = arith.constant 16 : index
    %54 = memref.load %arg1[%c16] : memref<60xf32, #tpu.memory_space<smem>>
    %55 = vector.broadcast %54 : f32 to vector<1x128xf32>
    %56 = arith.select %41, %55, %36 : vector<1x128xi1>, vector<1x128xf32>
    %c17 = arith.constant 17 : index
    %57 = memref.load %arg1[%c17] : memref<60xf32, #tpu.memory_space<smem>>
    %58 = vector.broadcast %57 : f32 to vector<1x128xf32>
    %59 = arith.select %41, %58, %39 : vector<1x128xi1>, vector<1x128xf32>
    %c3_i32 = arith.constant 3 : i32
    %60 = vector.broadcast %c3_i32 : i32 to vector<1x128xi32>
    %61 = arith.cmpi eq, %0, %60 : vector<1x128xi32>
    %c18 = arith.constant 18 : index
    %62 = memref.load %arg1[%c18] : memref<60xf32, #tpu.memory_space<smem>>
    %63 = vector.broadcast %62 : f32 to vector<1x128xf32>
    %64 = arith.select %61, %63, %44 : vector<1x128xi1>, vector<1x128xf32>
    %c19 = arith.constant 19 : index
    %65 = memref.load %arg1[%c19] : memref<60xf32, #tpu.memory_space<smem>>
    %66 = vector.broadcast %65 : f32 to vector<1x128xf32>
    %67 = arith.select %61, %66, %47 : vector<1x128xi1>, vector<1x128xf32>
    %c20 = arith.constant 20 : index
    %68 = memref.load %arg1[%c20] : memref<60xf32, #tpu.memory_space<smem>>
    %69 = vector.broadcast %68 : f32 to vector<1x128xf32>
    %70 = arith.select %61, %69, %50 : vector<1x128xi1>, vector<1x128xf32>
    %c21 = arith.constant 21 : index
    %71 = memref.load %arg1[%c21] : memref<60xf32, #tpu.memory_space<smem>>
    %72 = vector.broadcast %71 : f32 to vector<1x128xf32>
    %73 = arith.select %61, %72, %53 : vector<1x128xi1>, vector<1x128xf32>
    %c22 = arith.constant 22 : index
    %74 = memref.load %arg1[%c22] : memref<60xf32, #tpu.memory_space<smem>>
    %75 = vector.broadcast %74 : f32 to vector<1x128xf32>
    %76 = arith.select %61, %75, %56 : vector<1x128xi1>, vector<1x128xf32>
    %c23 = arith.constant 23 : index
    %77 = memref.load %arg1[%c23] : memref<60xf32, #tpu.memory_space<smem>>
    %78 = vector.broadcast %77 : f32 to vector<1x128xf32>
    %79 = arith.select %61, %78, %59 : vector<1x128xi1>, vector<1x128xf32>
    %c4_i32 = arith.constant 4 : i32
    %80 = vector.broadcast %c4_i32 : i32 to vector<1x128xi32>
    %81 = arith.cmpi eq, %0, %80 : vector<1x128xi32>
    %c24 = arith.constant 24 : index
    %82 = memref.load %arg1[%c24] : memref<60xf32, #tpu.memory_space<smem>>
    %83 = vector.broadcast %82 : f32 to vector<1x128xf32>
    %84 = arith.select %81, %83, %64 : vector<1x128xi1>, vector<1x128xf32>
    %c25 = arith.constant 25 : index
    %85 = memref.load %arg1[%c25] : memref<60xf32, #tpu.memory_space<smem>>
    %86 = vector.broadcast %85 : f32 to vector<1x128xf32>
    %87 = arith.select %81, %86, %67 : vector<1x128xi1>, vector<1x128xf32>
    %c26 = arith.constant 26 : index
    %88 = memref.load %arg1[%c26] : memref<60xf32, #tpu.memory_space<smem>>
    %89 = vector.broadcast %88 : f32 to vector<1x128xf32>
    %90 = arith.select %81, %89, %70 : vector<1x128xi1>, vector<1x128xf32>
    %c27 = arith.constant 27 : index
    %91 = memref.load %arg1[%c27] : memref<60xf32, #tpu.memory_space<smem>>
    %92 = vector.broadcast %91 : f32 to vector<1x128xf32>
    %93 = arith.select %81, %92, %73 : vector<1x128xi1>, vector<1x128xf32>
    %c28 = arith.constant 28 : index
    %94 = memref.load %arg1[%c28] : memref<60xf32, #tpu.memory_space<smem>>
    %95 = vector.broadcast %94 : f32 to vector<1x128xf32>
    %96 = arith.select %81, %95, %76 : vector<1x128xi1>, vector<1x128xf32>
    %c29 = arith.constant 29 : index
    %97 = memref.load %arg1[%c29] : memref<60xf32, #tpu.memory_space<smem>>
    %98 = vector.broadcast %97 : f32 to vector<1x128xf32>
    %99 = arith.select %81, %98, %79 : vector<1x128xi1>, vector<1x128xf32>
    %c5_i32 = arith.constant 5 : i32
    %100 = vector.broadcast %c5_i32 : i32 to vector<1x128xi32>
    %101 = arith.cmpi eq, %0, %100 : vector<1x128xi32>
    %c30 = arith.constant 30 : index
    %102 = memref.load %arg1[%c30] : memref<60xf32, #tpu.memory_space<smem>>
    %103 = vector.broadcast %102 : f32 to vector<1x128xf32>
    %104 = arith.select %101, %103, %84 : vector<1x128xi1>, vector<1x128xf32>
    %c31 = arith.constant 31 : index
    %105 = memref.load %arg1[%c31] : memref<60xf32, #tpu.memory_space<smem>>
    %106 = vector.broadcast %105 : f32 to vector<1x128xf32>
    %107 = arith.select %101, %106, %87 : vector<1x128xi1>, vector<1x128xf32>
    %c32 = arith.constant 32 : index
    %108 = memref.load %arg1[%c32] : memref<60xf32, #tpu.memory_space<smem>>
    %109 = vector.broadcast %108 : f32 to vector<1x128xf32>
    %110 = arith.select %101, %109, %90 : vector<1x128xi1>, vector<1x128xf32>
    %c33 = arith.constant 33 : index
    %111 = memref.load %arg1[%c33] : memref<60xf32, #tpu.memory_space<smem>>
    %112 = vector.broadcast %111 : f32 to vector<1x128xf32>
    %113 = arith.select %101, %112, %93 : vector<1x128xi1>, vector<1x128xf32>
    %c34 = arith.constant 34 : index
    %114 = memref.load %arg1[%c34] : memref<60xf32, #tpu.memory_space<smem>>
    %115 = vector.broadcast %114 : f32 to vector<1x128xf32>
    %116 = arith.select %101, %115, %96 : vector<1x128xi1>, vector<1x128xf32>
    %c35 = arith.constant 35 : index
    %117 = memref.load %arg1[%c35] : memref<60xf32, #tpu.memory_space<smem>>
    %118 = vector.broadcast %117 : f32 to vector<1x128xf32>
    %119 = arith.select %101, %118, %99 : vector<1x128xi1>, vector<1x128xf32>
    %c6_i32 = arith.constant 6 : i32
    %120 = vector.broadcast %c6_i32 : i32 to vector<1x128xi32>
    %121 = arith.cmpi eq, %0, %120 : vector<1x128xi32>
    %c36 = arith.constant 36 : index
    %122 = memref.load %arg1[%c36] : memref<60xf32, #tpu.memory_space<smem>>
    %123 = vector.broadcast %122 : f32 to vector<1x128xf32>
    %124 = arith.select %121, %123, %104 : vector<1x128xi1>, vector<1x128xf32>
    %c37 = arith.constant 37 : index
    %125 = memref.load %arg1[%c37] : memref<60xf32, #tpu.memory_space<smem>>
    %126 = vector.broadcast %125 : f32 to vector<1x128xf32>
    %127 = arith.select %121, %126, %107 : vector<1x128xi1>, vector<1x128xf32>
    %c38 = arith.constant 38 : index
    %128 = memref.load %arg1[%c38] : memref<60xf32, #tpu.memory_space<smem>>
    %129 = vector.broadcast %128 : f32 to vector<1x128xf32>
    %130 = arith.select %121, %129, %110 : vector<1x128xi1>, vector<1x128xf32>
    %c39 = arith.constant 39 : index
    %131 = memref.load %arg1[%c39] : memref<60xf32, #tpu.memory_space<smem>>
    %132 = vector.broadcast %131 : f32 to vector<1x128xf32>
    %133 = arith.select %121, %132, %113 : vector<1x128xi1>, vector<1x128xf32>
    %c40 = arith.constant 40 : index
    %134 = memref.load %arg1[%c40] : memref<60xf32, #tpu.memory_space<smem>>
    %135 = vector.broadcast %134 : f32 to vector<1x128xf32>
    %136 = arith.select %121, %135, %116 : vector<1x128xi1>, vector<1x128xf32>
    %c41 = arith.constant 41 : index
    %137 = memref.load %arg1[%c41] : memref<60xf32, #tpu.memory_space<smem>>
    %138 = vector.broadcast %137 : f32 to vector<1x128xf32>
    %139 = arith.select %121, %138, %119 : vector<1x128xi1>, vector<1x128xf32>
    %c7_i32 = arith.constant 7 : i32
    %140 = vector.broadcast %c7_i32 : i32 to vector<1x128xi32>
    %141 = arith.cmpi eq, %0, %140 : vector<1x128xi32>
    %c42 = arith.constant 42 : index
    %142 = memref.load %arg1[%c42] : memref<60xf32, #tpu.memory_space<smem>>
    %143 = vector.broadcast %142 : f32 to vector<1x128xf32>
    %144 = arith.select %141, %143, %124 : vector<1x128xi1>, vector<1x128xf32>
    %c43 = arith.constant 43 : index
    %145 = memref.load %arg1[%c43] : memref<60xf32, #tpu.memory_space<smem>>
    %146 = vector.broadcast %145 : f32 to vector<1x128xf32>
    %147 = arith.select %141, %146, %127 : vector<1x128xi1>, vector<1x128xf32>
    %c44 = arith.constant 44 : index
    %148 = memref.load %arg1[%c44] : memref<60xf32, #tpu.memory_space<smem>>
    %149 = vector.broadcast %148 : f32 to vector<1x128xf32>
    %150 = arith.select %141, %149, %130 : vector<1x128xi1>, vector<1x128xf32>
    %c45 = arith.constant 45 : index
    %151 = memref.load %arg1[%c45] : memref<60xf32, #tpu.memory_space<smem>>
    %152 = vector.broadcast %151 : f32 to vector<1x128xf32>
    %153 = arith.select %141, %152, %133 : vector<1x128xi1>, vector<1x128xf32>
    %c46 = arith.constant 46 : index
    %154 = memref.load %arg1[%c46] : memref<60xf32, #tpu.memory_space<smem>>
    %155 = vector.broadcast %154 : f32 to vector<1x128xf32>
    %156 = arith.select %141, %155, %136 : vector<1x128xi1>, vector<1x128xf32>
    %c47 = arith.constant 47 : index
    %157 = memref.load %arg1[%c47] : memref<60xf32, #tpu.memory_space<smem>>
    %158 = vector.broadcast %157 : f32 to vector<1x128xf32>
    %159 = arith.select %141, %158, %139 : vector<1x128xi1>, vector<1x128xf32>
    %c8_i32 = arith.constant 8 : i32
    %160 = vector.broadcast %c8_i32 : i32 to vector<1x128xi32>
    %161 = arith.cmpi eq, %0, %160 : vector<1x128xi32>
    %c48 = arith.constant 48 : index
    %162 = memref.load %arg1[%c48] : memref<60xf32, #tpu.memory_space<smem>>
    %163 = vector.broadcast %162 : f32 to vector<1x128xf32>
    %164 = arith.select %161, %163, %144 : vector<1x128xi1>, vector<1x128xf32>
    %c49 = arith.constant 49 : index
    %165 = memref.load %arg1[%c49] : memref<60xf32, #tpu.memory_space<smem>>
    %166 = vector.broadcast %165 : f32 to vector<1x128xf32>
    %167 = arith.select %161, %166, %147 : vector<1x128xi1>, vector<1x128xf32>
    %c50 = arith.constant 50 : index
    %168 = memref.load %arg1[%c50] : memref<60xf32, #tpu.memory_space<smem>>
    %169 = vector.broadcast %168 : f32 to vector<1x128xf32>
    %170 = arith.select %161, %169, %150 : vector<1x128xi1>, vector<1x128xf32>
    %c51 = arith.constant 51 : index
    %171 = memref.load %arg1[%c51] : memref<60xf32, #tpu.memory_space<smem>>
    %172 = vector.broadcast %171 : f32 to vector<1x128xf32>
    %173 = arith.select %161, %172, %153 : vector<1x128xi1>, vector<1x128xf32>
    %c52 = arith.constant 52 : index
    %174 = memref.load %arg1[%c52] : memref<60xf32, #tpu.memory_space<smem>>
    %175 = vector.broadcast %174 : f32 to vector<1x128xf32>
    %176 = arith.select %161, %175, %156 : vector<1x128xi1>, vector<1x128xf32>
    %c53 = arith.constant 53 : index
    %177 = memref.load %arg1[%c53] : memref<60xf32, #tpu.memory_space<smem>>
    %178 = vector.broadcast %177 : f32 to vector<1x128xf32>
    %179 = arith.select %161, %178, %159 : vector<1x128xi1>, vector<1x128xf32>
    %c9_i32 = arith.constant 9 : i32
    %180 = vector.broadcast %c9_i32 : i32 to vector<1x128xi32>
    %181 = arith.cmpi eq, %0, %180 : vector<1x128xi32>
    %c54 = arith.constant 54 : index
    %182 = memref.load %arg1[%c54] : memref<60xf32, #tpu.memory_space<smem>>
    %183 = vector.broadcast %182 : f32 to vector<1x128xf32>
    %184 = arith.select %181, %183, %164 : vector<1x128xi1>, vector<1x128xf32>
    %c55 = arith.constant 55 : index
    %185 = memref.load %arg1[%c55] : memref<60xf32, #tpu.memory_space<smem>>
    %186 = vector.broadcast %185 : f32 to vector<1x128xf32>
    %187 = arith.select %181, %186, %167 : vector<1x128xi1>, vector<1x128xf32>
    %c56 = arith.constant 56 : index
    %188 = memref.load %arg1[%c56] : memref<60xf32, #tpu.memory_space<smem>>
    %189 = vector.broadcast %188 : f32 to vector<1x128xf32>
    %190 = arith.select %181, %189, %170 : vector<1x128xi1>, vector<1x128xf32>
    %c57 = arith.constant 57 : index
    %191 = memref.load %arg1[%c57] : memref<60xf32, #tpu.memory_space<smem>>
    %192 = vector.broadcast %191 : f32 to vector<1x128xf32>
    %193 = arith.select %181, %192, %173 : vector<1x128xi1>, vector<1x128xf32>
    %c58 = arith.constant 58 : index
    %194 = memref.load %arg1[%c58] : memref<60xf32, #tpu.memory_space<smem>>
    %195 = vector.broadcast %194 : f32 to vector<1x128xf32>
    %196 = arith.select %181, %195, %176 : vector<1x128xi1>, vector<1x128xf32>
    %c59 = arith.constant 59 : index
    %197 = memref.load %arg1[%c59] : memref<60xf32, #tpu.memory_space<smem>>
    %198 = vector.broadcast %197 : f32 to vector<1x128xf32>
    %199 = arith.select %181, %198, %179 : vector<1x128xi1>, vector<1x128xf32>
    %200 = arith.mulf %193, %193 : vector<1x128xf32>
    %201 = arith.mulf %196, %196 : vector<1x128xf32>
    %202 = arith.mulf %199, %199 : vector<1x128xf32>
    %203 = arith.addf %200, %201 : vector<1x128xf32>
    %204 = arith.addf %203, %202 : vector<1x128xf32>
    %cst_2 = arith.constant 9.99999974E-5 : f32
    %205 = vector.broadcast %cst_2 : f32 to vector<1x128xf32>
    %206 = arith.maximumf %204, %205 : vector<1x128xf32>
    %207 = math.rsqrt %206 : vector<1x128xf32>
    %208 = arith.mulf %206, %207 : vector<1x128xf32>
    %209 = math.sin %208 : vector<1x128xf32>
    %210 = arith.mulf %207, %209 : vector<1x128xf32>
    %211 = arith.mulf %207, %207 : vector<1x128xf32>
    %212 = math.cos %208 : vector<1x128xf32>
    %cst_3 = arith.constant 1.000000e+00 : f32
    %213 = vector.broadcast %cst_3 : f32 to vector<1x128xf32>
    %214 = arith.subf %213, %212 : vector<1x128xf32>
    %215 = arith.mulf %211, %214 : vector<1x128xf32>
    %216 = arith.mulf %210, %193 : vector<1x128xf32>
    %217 = arith.mulf %210, %196 : vector<1x128xf32>
    %218 = arith.mulf %210, %199 : vector<1x128xf32>
    %219 = arith.mulf %215, %193 : vector<1x128xf32>
    %220 = arith.mulf %219, %196 : vector<1x128xf32>
    %221 = arith.mulf %219, %199 : vector<1x128xf32>
    %222 = arith.mulf %215, %196 : vector<1x128xf32>
    %223 = arith.mulf %222, %199 : vector<1x128xf32>
    %224 = arith.mulf %215, %204 : vector<1x128xf32>
    %cst_4 = arith.constant 1.000000e+00 : f32
    %225 = vector.broadcast %cst_4 : f32 to vector<1x128xf32>
    %226 = arith.subf %225, %224 : vector<1x128xf32>
    %227 = arith.mulf %215, %200 : vector<1x128xf32>
    %228 = arith.addf %226, %227 : vector<1x128xf32>
    %229 = arith.subf %220, %218 : vector<1x128xf32>
    %230 = arith.addf %221, %217 : vector<1x128xf32>
    %231 = arith.addf %220, %218 : vector<1x128xf32>
    %232 = arith.mulf %215, %201 : vector<1x128xf32>
    %233 = arith.addf %226, %232 : vector<1x128xf32>
    %234 = arith.subf %223, %216 : vector<1x128xf32>
    %235 = arith.subf %221, %217 : vector<1x128xf32>
    %236 = arith.addf %223, %216 : vector<1x128xf32>
    %237 = arith.mulf %215, %202 : vector<1x128xf32>
    %238 = arith.addf %226, %237 : vector<1x128xf32>
    %c0_5 = arith.constant 0 : index
    %c0_6 = arith.constant 0 : index
    %c0_7 = arith.constant 0 : index
    %239 = vector.load %arg3[%c0_5, %c0_6, %c0_7] : memref<12x1x128xf32, #tpu.memory_space<vmem>>, vector<1x1x128xf32>
    %240 = vector.shape_cast %239 : vector<1x1x128xf32> to vector<1x128xf32>
    %241 = vector.shape_cast %228 : vector<1x128xf32> to vector<1x1x128xf32>
    tpu.vector_store %arg3[%c0_5, %c0_6, %c0_7], %241 {strides = array<i32>} : memref<12x1x128xf32, #tpu.memory_space<vmem>>, vector<1x1x128xf32>,
    %c1_8 = arith.constant 1 : index
    %c0_9 = arith.constant 0 : index
    %c0_10 = arith.constant 0 : index
    %242 = vector.load %arg3[%c1_8, %c0_9, %c0_10] : memref<12x1x128xf32, #tpu.memory_space<vmem>>, vector<1x1x128xf32>
    %243 = vector.shape_cast %242 : vector<1x1x128xf32> to vector<1x128xf32>
    %244 = vector.shape_cast %229 : vector<1x128xf32> to vector<1x1x128xf32>
    tpu.vector_store %arg3[%c1_8, %c0_9, %c0_10], %244 {strides = array<i32>} : memref<12x1x128xf32, #tpu.memory_space<vmem>>, vector<1x1x128xf32>,
    %c2_11 = arith.constant 2 : index
    %c0_12 = arith.constant 0 : index
    %c0_13 = arith.constant 0 : index
    %245 = vector.load %arg3[%c2_11, %c0_12, %c0_13] : memref<12x1x128xf32, #tpu.memory_space<vmem>>, vector<1x1x128xf32>
    %246 = vector.shape_cast %245 : vector<1x1x128xf32> to vector<1x128xf32>
    %247 = vector.shape_cast %230 : vector<1x128xf32> to vector<1x1x128xf32>
    tpu.vector_store %arg3[%c2_11, %c0_12, %c0_13], %247 {strides = array<i32>} : memref<12x1x128xf32, #tpu.memory_space<vmem>>, vector<1x1x128xf32>,
    %c3_14 = arith.constant 3 : index
    %c0_15 = arith.constant 0 : index
    %c0_16 = arith.constant 0 : index
    %248 = vector.load %arg3[%c3_14, %c0_15, %c0_16] : memref<12x1x128xf32, #tpu.memory_space<vmem>>, vector<1x1x128xf32>
    %249 = vector.shape_cast %248 : vector<1x1x128xf32> to vector<1x128xf32>
    %250 = vector.shape_cast %184 : vector<1x128xf32> to vector<1x1x128xf32>
    tpu.vector_store %arg3[%c3_14, %c0_15, %c0_16], %250 {strides = array<i32>} : memref<12x1x128xf32, #tpu.memory_space<vmem>>, vector<1x1x128xf32>,
    %c4_17 = arith.constant 4 : index
    %c0_18 = arith.constant 0 : index
    %c0_19 = arith.constant 0 : index
    %251 = vector.load %arg3[%c4_17, %c0_18, %c0_19] : memref<12x1x128xf32, #tpu.memory_space<vmem>>, vector<1x1x128xf32>
    %252 = vector.shape_cast %251 : vector<1x1x128xf32> to vector<1x128xf32>
    %253 = vector.shape_cast %231 : vector<1x128xf32> to vector<1x1x128xf32>
    tpu.vector_store %arg3[%c4_17, %c0_18, %c0_19], %253 {strides = array<i32>} : memref<12x1x128xf32, #tpu.memory_space<vmem>>, vector<1x1x128xf32>,
    %c5_20 = arith.constant 5 : index
    %c0_21 = arith.constant 0 : index
    %c0_22 = arith.constant 0 : index
    %254 = vector.load %arg3[%c5_20, %c0_21, %c0_22] : memref<12x1x128xf32, #tpu.memory_space<vmem>>, vector<1x1x128xf32>
    %255 = vector.shape_cast %254 : vector<1x1x128xf32> to vector<1x128xf32>
    %256 = vector.shape_cast %233 : vector<1x128xf32> to vector<1x1x128xf32>
    tpu.vector_store %arg3[%c5_20, %c0_21, %c0_22], %256 {strides = array<i32>} : memref<12x1x128xf32, #tpu.memory_space<vmem>>, vector<1x1x128xf32>,
    %c6_23 = arith.constant 6 : index
    %c0_24 = arith.constant 0 : index
    %c0_25 = arith.constant 0 : index
    %257 = vector.load %arg3[%c6_23, %c0_24, %c0_25] : memref<12x1x128xf32, #tpu.memory_space<vmem>>, vector<1x1x128xf32>
    %258 = vector.shape_cast %257 : vector<1x1x128xf32> to vector<1x128xf32>
    %259 = vector.shape_cast %234 : vector<1x128xf32> to vector<1x1x128xf32>
    tpu.vector_store %arg3[%c6_23, %c0_24, %c0_25], %259 {strides = array<i32>} : memref<12x1x128xf32, #tpu.memory_space<vmem>>, vector<1x1x128xf32>,
    %c7_26 = arith.constant 7 : index
    %c0_27 = arith.constant 0 : index
    %c0_28 = arith.constant 0 : index
    %260 = vector.load %arg3[%c7_26, %c0_27, %c0_28] : memref<12x1x128xf32, #tpu.memory_space<vmem>>, vector<1x1x128xf32>
    %261 = vector.shape_cast %260 : vector<1x1x128xf32> to vector<1x128xf32>
    %262 = vector.shape_cast %187 : vector<1x128xf32> to vector<1x1x128xf32>
    tpu.vector_store %arg3[%c7_26, %c0_27, %c0_28], %262 {strides = array<i32>} : memref<12x1x128xf32, #tpu.memory_space<vmem>>, vector<1x1x128xf32>,
    %c8_29 = arith.constant 8 : index
    %c0_30 = arith.constant 0 : index
    %c0_31 = arith.constant 0 : index
    %263 = vector.load %arg3[%c8_29, %c0_30, %c0_31] : memref<12x1x128xf32, #tpu.memory_space<vmem>>, vector<1x1x128xf32>
    %264 = vector.shape_cast %263 : vector<1x1x128xf32> to vector<1x128xf32>
    %265 = vector.shape_cast %235 : vector<1x128xf32> to vector<1x1x128xf32>
    tpu.vector_store %arg3[%c8_29, %c0_30, %c0_31], %265 {strides = array<i32>} : memref<12x1x128xf32, #tpu.memory_space<vmem>>, vector<1x1x128xf32>,
    %c9_32 = arith.constant 9 : index
    %c0_33 = arith.constant 0 : index
    %c0_34 = arith.constant 0 : index
    %266 = vector.load %arg3[%c9_32, %c0_33, %c0_34] : memref<12x1x128xf32, #tpu.memory_space<vmem>>, vector<1x1x128xf32>
    %267 = vector.shape_cast %266 : vector<1x1x128xf32> to vector<1x128xf32>
    %268 = vector.shape_cast %236 : vector<1x128xf32> to vector<1x1x128xf32>
    tpu.vector_store %arg3[%c9_32, %c0_33, %c0_34], %268 {strides = array<i32>} : memref<12x1x128xf32, #tpu.memory_space<vmem>>, vector<1x1x128xf32>,
    %c10_35 = arith.constant 10 : index
    %c0_36 = arith.constant 0 : index
    %c0_37 = arith.constant 0 : index
    %269 = vector.load %arg3[%c10_35, %c0_36, %c0_37] : memref<12x1x128xf32, #tpu.memory_space<vmem>>, vector<1x1x128xf32>
    %270 = vector.shape_cast %269 : vector<1x1x128xf32> to vector<1x128xf32>
    %271 = vector.shape_cast %238 : vector<1x128xf32> to vector<1x1x128xf32>
    tpu.vector_store %arg3[%c10_35, %c0_36, %c0_37], %271 {strides = array<i32>} : memref<12x1x128xf32, #tpu.memory_space<vmem>>, vector<1x1x128xf32>,
    %c11_38 = arith.constant 11 : index
    %c0_39 = arith.constant 0 : index
    %c0_40 = arith.constant 0 : index
    %272 = vector.load %arg3[%c11_38, %c0_39, %c0_40] : memref<12x1x128xf32, #tpu.memory_space<vmem>>, vector<1x1x128xf32>
    %273 = vector.shape_cast %272 : vector<1x1x128xf32> to vector<1x128xf32>
    %274 = vector.shape_cast %190 : vector<1x128xf32> to vector<1x1x128xf32>
    tpu.vector_store %arg3[%c11_38, %c0_39, %c0_40], %274 {strides = array<i32>} : memref<12x1x128xf32, #tpu.memory_space<vmem>>, vector<1x1x128xf32>,
    return
  }
  func.func @transform_0(%arg0: i32) -> i32 {
    %c0_i32 = arith.constant 0 : i32
    %c0_i32_0 = arith.constant 0 : i32
    return %c0_i32 : i32
  }
  func.func @transform_1(%arg0: i32) -> (i32, i32) {
    %c0_i32 = arith.constant 0 : i32
    %c0_i32_0 = arith.constant 0 : i32
    return %arg0, %c0_i32 : i32, i32
  }
  func.func @transform_2(%arg0: i32) -> (i32, i32, i32) {
    %c0_i32 = arith.constant 0 : i32
    %c0_i32_0 = arith.constant 0 : i32
    %c0_i32_1 = arith.constant 0 : i32
    return %c0_i32, %arg0, %c0_i32_0 : i32, i32, i32
  }
}

</mosaic_0001>

<llo_original>
// kernel: _camera_correction.1
$region0: #{_camera_correction.1}
  #allocation0 [shape = 'u32[]', space=smem, size = 0x4, offset = 0x4, fixed_abs, tag = 'smem constant byte address 0x4 - core index']
  #allocation1 [shape = 'u32[144,128]{1,0:T(1,128)}', space=vmem, size = 0x12000, scoped, tag = 'internal scratch']
  %s0 = inlined_call_operand.vmem [shape: f32[60], index: 0, kind: input, shape index: {}]
  %s1 = inlined_call_operand.vmem [shape: s32[1,128], index: 1, kind: input, shape index: {}]
  %s2 = inlined_call_operand.hbm [shape: f32[12,1,128], index: 2, kind: output, shape index: {}]
  %s3 = sld [smem:[#allocation0]]
  $region22: #{_camera_correction.1} parent=0
    _
  %s5 = ssub.s32 1, %s3
  %s6 = scalar_select 0, %s5, %s3
  $region1: #{_camera_correction.1} parent=0
    #allocation2 [shape = 'u8[512]{0}', space=smem, size = 0x200, scoped, tag = 'input window, operand 0, single buffered']
    #allocation3 [shape = 's32[1]{0}', space=sflag, size = 0x4, scoped, tag = 'scoped memory for _camera_correction.1']
    #allocation4 [shape = 's32[1]{0}', space=sflag, size = 0x4, scoped, tag = 'scoped memory for _camera_correction.1']
    #allocation5 [shape = 'u8[6144]{0}', space=vmem, size = 0x1800, scoped, tag = 'output window, operand 0, single buffered']
    %7 = vsyncpa [#allocation4], 0
    %8 = vsyncpa [#allocation3], 0
    // Predicated region
    $region2: #{_camera_correction.1} parent=1 // pred_check
      _
    $region3: #{_camera_correction.1} parent=1 // pred_check_branch
      %10 = sbr.rel (0) target = $region5
    $region4: #{_camera_correction.1} parent=1 // pred_region
      %s12 = ssub.s32 16, 16
      %13 = vsyncadd [#allocation4], %s12
      %s15 = sshll.u32 %s0, 4
      %s16 = int_to_ptr.vmem [resolvable:$true] %s15
      %18 = dma.vmem_to_smem %s16, 16, [#allocation2], [#allocation4]
    $region5: #{_camera_correction.1} parent=1 // pred_fallthru
      _
    // Predicated region
    $region6: #{_camera_correction.1} parent=1 // pred_check
      _
    $region7: #{_camera_correction.1} parent=1 // pred_check_branch
      %20 = sbr.rel (0) target = $region9
    $region8: #{_camera_correction.1} parent=1 // pred_region
      _
    $region9: #{_camera_correction.1} parent=1 // pred_fallthru
      _
    // Predicated region
    $region10: #{_camera_correction.1} parent=1 // pred_check
      _
    $region11: #{_camera_correction.1} parent=1 // pred_check_branch
      %22 = sbr.rel (0) target = $region13
    $region12: #{_camera_correction.1} parent=1 // pred_region
      %23 = dma.done [#allocation4], 16
    $region13: #{_camera_correction.1} parent=1 // pred_fallthru
      _
    %24 = sfence
    %v25 = vld [vmem:[%s1] sm:$0x1]
    %s26 = sld [smem:[#allocation2]]
    %v27 = vstv %s26
    %v28 = vadd.f32 %v27, 0.0
    %s29 = sld [smem:[#allocation2 + $0x1]]
    %v30 = vstv %s29
    %v31 = vadd.f32 %v30, 0.0
    %s32 = sld [smem:[#allocation2 + $0x2]]
    %v33 = vstv %s32
    %v34 = vadd.f32 %v33, 0.0
    %s35 = sld [smem:[#allocation2 + $0x3]]
    %v36 = vstv %s35
    %v37 = vadd.f32 %v36, 0.0
    %s38 = sld [smem:[#allocation2 + $0x4]]
    %v39 = vstv %s38
    %v40 = vadd.f32 %v39, 0.0
    %s41 = sld [smem:[#allocation2 + $0x5]]
    %v42 = vstv %s41
    %v43 = vadd.f32 %v42, 0.0
    %vm44 = vcmp.eq.s32.totalorder %v25, 1
    %s45 = sld [smem:[#allocation2 + $0x6]]
    %v46 = vstv %s45
    %v47 = vsel %vm44, %v46, %v28
    %s48 = sld [smem:[#allocation2 + $0x7]]
    %v49 = vstv %s48
    %v50 = vsel %vm44, %v49, %v31
    %s51 = sld [smem:[#allocation2 + $0x8]]
    %v52 = vstv %s51
    %v53 = vsel %vm44, %v52, %v34
    %s54 = sld [smem:[#allocation2 + $0x9]]
    %v55 = vstv %s54
    %v56 = vsel %vm44, %v55, %v37
    %s57 = sld [smem:[#allocation2 + $0xa]]
    %v58 = vstv %s57
    %v59 = vsel %vm44, %v58, %v40
    %s60 = sld [smem:[#allocation2 + $0xb]]
    %v61 = vstv %s60
    %v62 = vsel %vm44, %v61, %v43
    %vm63 = vcmp.eq.s32.totalorder %v25, 2
    %s64 = sld [smem:[#allocation2 + $0xc]]
    %v65 = vstv %s64
    %v66 = vsel %vm63, %v65, %v47
    %s67 = sld [smem:[#allocation2 + $0xd]]
    %v68 = vstv %s67
    %v69 = vsel %vm63, %v68, %v50
    %s70 = sld [smem:[#allocation2 + $0xe]]
    %v71 = vstv %s70
    %v72 = vsel %vm63, %v71, %v53
    %s73 = sld [smem:[#allocation2 + $0xf]]
    %v74 = vstv %s73
    %v75 = vsel %vm63, %v74, %v56
    %s76 = sld [smem:[#allocation2 + $0x10]]
    %v77 = vstv %s76
    %v78 = vsel %vm63, %v77, %v59
    %s79 = sld [smem:[#allocation2 + $0x11]]
    %v80 = vstv %s79
    %v81 = vsel %vm63, %v80, %v62
    %vm82 = vcmp.eq.s32.totalorder %v25, 3
    %s83 = sld [smem:[#allocation2 + $0x12]]
    %v84 = vstv %s83
    %v85 = vsel %vm82, %v84, %v66
    %s86 = sld [smem:[#allocation2 + $0x13]]
    %v87 = vstv %s86
    %v88 = vsel %vm82, %v87, %v69
    %s89 = sld [smem:[#allocation2 + $0x14]]
    %v90 = vstv %s89
    %v91 = vsel %vm82, %v90, %v72
    %s92 = sld [smem:[#allocation2 + $0x15]]
    %v93 = vstv %s92
    %v94 = vsel %vm82, %v93, %v75
    %s95 = sld [smem:[#allocation2 + $0x16]]
    %v96 = vstv %s95
    %v97 = vsel %vm82, %v96, %v78
    %s98 = sld [smem:[#allocation2 + $0x17]]
    %v99 = vstv %s98
    %v100 = vsel %vm82, %v99, %v81
    %vm101 = vcmp.eq.s32.totalorder %v25, 4
    %s102 = sld [smem:[#allocation2 + $0x18]]
    %v103 = vstv %s102
    %v104 = vsel %vm101, %v103, %v85
    %s105 = sld [smem:[#allocation2 + $0x19]]
    %v106 = vstv %s105
    %v107 = vsel %vm101, %v106, %v88
    %s108 = sld [smem:[#allocation2 + $0x1a]]
    %v109 = vstv %s108
    %v110 = vsel %vm101, %v109, %v91
    %s111 = sld [smem:[#allocation2 + $0x1b]]
    %v112 = vstv %s111
    %v113 = vsel %vm101, %v112, %v94
    %s114 = sld [smem:[#allocation2 + $0x1c]]
    %v115 = vstv %s114
    %v116 = vsel %vm101, %v115, %v97
    %s117 = sld [smem:[#allocation2 + $0x1d]]
    %v118 = vstv %s117
    %v119 = vsel %vm101, %v118, %v100
    %vm120 = vcmp.eq.s32.totalorder %v25, 5
    %s121 = sld [smem:[#allocation2 + $0x1e]]
    %v122 = vstv %s121
    %v123 = vsel %vm120, %v122, %v104
    %s124 = sld [smem:[#allocation2 + $0x1f]]
    %v125 = vstv %s124
    %v126 = vsel %vm120, %v125, %v107
    %s127 = sld [smem:[#allocation2 + $0x20]]
    %v128 = vstv %s127
    %v129 = vsel %vm120, %v128, %v110
    %s130 = sld [smem:[#allocation2 + $0x21]]
    %v131 = vstv %s130
    %v132 = vsel %vm120, %v131, %v113
    %s133 = sld [smem:[#allocation2 + $0x22]]
    %v134 = vstv %s133
    %v135 = vsel %vm120, %v134, %v116
    %s136 = sld [smem:[#allocation2 + $0x23]]
    %v137 = vstv %s136
    %v138 = vsel %vm120, %v137, %v119
    %vm139 = vcmp.eq.s32.totalorder %v25, 6
    %s140 = sld [smem:[#allocation2 + $0x24]]
    %v141 = vstv %s140
    %v142 = vsel %vm139, %v141, %v123
    %s143 = sld [smem:[#allocation2 + $0x25]]
    %v144 = vstv %s143
    %v145 = vsel %vm139, %v144, %v126
    %s146 = sld [smem:[#allocation2 + $0x26]]
    %v147 = vstv %s146
    %v148 = vsel %vm139, %v147, %v129
    %s149 = sld [smem:[#allocation2 + $0x27]]
    %v150 = vstv %s149
    %v151 = vsel %vm139, %v150, %v132
    %s152 = sld [smem:[#allocation2 + $0x28]]
    %v153 = vstv %s152
    %v154 = vsel %vm139, %v153, %v135
    %s155 = sld [smem:[#allocation2 + $0x29]]
    %v156 = vstv %s155
    %v157 = vsel %vm139, %v156, %v138
    %vm158 = vcmp.eq.s32.totalorder %v25, 7
    %s159 = sld [smem:[#allocation2 + $0x2a]]
    %v160 = vstv %s159
    %v161 = vsel %vm158, %v160, %v142
    %s162 = sld [smem:[#allocation2 + $0x2b]]
    %v163 = vstv %s162
    %v164 = vsel %vm158, %v163, %v145
    %s165 = sld [smem:[#allocation2 + $0x2c]]
    %v166 = vstv %s165
    %v167 = vsel %vm158, %v166, %v148
    %s168 = sld [smem:[#allocation2 + $0x2d]]
    %v169 = vstv %s168
    %v170 = vsel %vm158, %v169, %v151
    %s171 = sld [smem:[#allocation2 + $0x2e]]
    %v172 = vstv %s171
    %v173 = vsel %vm158, %v172, %v154
    %s174 = sld [smem:[#allocation2 + $0x2f]]
    %v175 = vstv %s174
    %v176 = vsel %vm158, %v175, %v157
    %vm177 = vcmp.eq.s32.totalorder %v25, 8
    %s178 = sld [smem:[#allocation2 + $0x30]]
    %v179 = vstv %s178
    %v180 = vsel %vm177, %v179, %v161
    %s181 = sld [smem:[#allocation2 + $0x31]]
    %v182 = vstv %s181
    %v183 = vsel %vm177, %v182, %v164
    %s184 = sld [smem:[#allocation2 + $0x32]]
    %v185 = vstv %s184
    %v186 = vsel %vm177, %v185, %v167
    %s187 = sld [smem:[#allocation2 + $0x33]]
    %v188 = vstv %s187
    %v189 = vsel %vm177, %v188, %v170
    %s190 = sld [smem:[#allocation2 + $0x34]]
    %v191 = vstv %s190
    %v192 = vsel %vm177, %v191, %v173
    %s193 = sld [smem:[#allocation2 + $0x35]]
    %v194 = vstv %s193
    %v195 = vsel %vm177, %v194, %v176
    %vm196 = vcmp.eq.s32.totalorder %v25, 9
    %s197 = sld [smem:[#allocation2 + $0x36]]
    %v198 = vstv %s197
    %v199 = vsel %vm196, %v198, %v180
    %s200 = sld [smem:[#allocation2 + $0x37]]
    %v201 = vstv %s200
    %v202 = vsel %vm196, %v201, %v183
    %s203 = sld [smem:[#allocation2 + $0x38]]
    %v204 = vstv %s203
    %v205 = vsel %vm196, %v204, %v186
    %s206 = sld [smem:[#allocation2 + $0x39]]
    %v207 = vstv %s206
    %v208 = vsel %vm196, %v207, %v189
    %s209 = sld [smem:[#allocation2 + $0x3a]]
    %v210 = vstv %s209
    %v211 = vsel %vm196, %v210, %v192
    %s212 = sld [smem:[#allocation2 + $0x3b]]
    %v213 = vstv %s212
    %v214 = vsel %vm196, %v213, %v195
    %v215 = vmul.f32 %v208, %v208
    %v216 = vmul.f32 %v211, %v211
    %v217 = vmul.f32 %v214, %v214
    %v218 = vadd.f32 %v215, %v216
    %v219 = vadd.f32 %v218, %v217
    %v220 = vmax.f32 %v219, 0.0001
    %v221 = vrsqrt.pop %v220
    %v222 = vmul.f32 %v220, %v221
    %v223 = vand.u32 2147483647, %v222
    %vm224 = vcmp.le.f32.partialorder %v223, 0.7853982
    %vm225 = vcmp.lt.s32.totalorder %v222, 0
    %v226 = vand.u32 %v222, 2139095040
    %v227 = vshrl.u32 %v226, 23
    %v228 = vsub.s32 %v227, 127
    %v229 = vand.u32 2147483647, %v222
    %v230 = vand.u32 %v229, 8388607
    %v231 = vor.u32 %v230, 8388608
    %v232 = vsub.s32 0, %v231
    %v233 = vadd.s32 %v228, 1
    %vm234 = vcmp.gt.s32.totalorder %v233, 0
    %v235 = vsel %vm234, %v233, 0
    %v236 = vshrl.u32 %v235, 5
    %v237 = vand.u32 %v235, 31
    %v238 = vsub.s32 32, %v237
    %v239 = vshrl.u32 683565275, %v238
    %v240 = vshll.u32 683565275, %v237
    %v241 = vshrl.u32 2475754826, %v238
    %v242 = vor.u32 %v240, %v241
    %v243 = vshll.u32 2475754826, %v237
    %v244 = vshrl.u32 2131351028, %v238
    %v245 = vor.u32 %v243, %v244
    %v246 = vshll.u32 2131351028, %v237
    %v247 = vshrl.u32 2102212464, %v238
    %v248 = vor.u32 %v246, %v247
    %v249 = vshll.u32 2102212464, %v237
    %v250 = vshrl.u32 920167782, %v238
    %v251 = vor.u32 %v249, %v250
    %v252 = vshll.u32 920167782, %v237
    %v253 = vshrl.u32 1326507024, %v238
    %v254 = vor.u32 %v252, %v253
    %vm255 = vcmp.lt.s32.totalorder %v236, 1
    %vm256 = vcmp.lt.s32.totalorder %v236, 2
    %vm257 = vcmp.lt.s32.totalorder %v236, 3
    %vm258 = vcmp.lt.s32.totalorder %v236, 4
    %v259 = vsel %vm255, %v239, %v242
    %v260 = vsel %vm258, %v248, 2102212464
    %v261 = vsel %vm257, %v245, %v260
    %v262 = vsel %vm256, %v259, %v261
    %v263 = vsel %vm255, %v242, %v245
    %v264 = vsel %vm258, %v251, 920167782
    %v265 = vsel %vm257, %v248, %v264
    %v266 = vsel %vm256, %v263, %v265
    %v267 = vsel %vm255, %v245, %v248
    %v268 = vsel %vm258, %v254, 1326507024
    %v269 = vsel %vm257, %v251, %v268
    %v270 = vsel %vm256, %v267, %v269
    %v271 = vshll.u32 %v231, 8
    %v272 = vmul.u32.u64.compose %v271, %v270
    %v273 = vextract.low.u32 %v272
    %v274 = vextract.high.u32 %v272
    %v275 = vmul.u32.u64.compose %v271, %v266
    %v276 = vextract.low.u32 %v275
    %v277 = vextract.high.u32 %v275
    %v278 = vmul.u32 %v271, %v262
    %v279 = vadd.s32 %v274, %v276
    %vm280 = vc.u32 %v274, %v276
    %v281 = vadd.s32 %v277, 1
    %v282 = vsel %vm280, %v281, %v277
    %v283 = vadd.s32 %v278, %v282
    %v284 = vadd.s32 %v283, 536870912
    %v285 = vshrl.u32 %v284, 30
    %v286 = vshll.u32 %v285, 30
    %v287 = vsub.s32 %v283, %v286
    %vm288 = vcmp.lt.s32.totalorder %v287, 0
    %v289 = vsub.s32 0, %v287
    %v290 = vsel %vm288, %v289, %v287
    %v291 = vclz %v290
    %v292 = vsub.s32 %v291, 2
    %vm293 = vcmp.gt.s32.totalorder 0, %v292
    %v294 = vsel %vm293, 0, %v292
    %v295 = vsub.s32 32, %v294
    %v296 = vshll.u32 %v287, %v294
    %v297 = vshrl.u32 %v279, %v295
    %v298 = vor.u32 %v296, %v297
    %v299 = vsub.s32 4294967266, %v294
    %v300 = vadd.s32 %v299, 127
    %v301 = vshll.u32 %v300, 23
    %v302 = vor.u32 4788187, %v301
    %v303 = vand.u32 2147483647, %v302
    %v305 = vcvt.s32.f32 %v298
    %v306 = vmul.f32 %v305, %v303
    %v307 = vxor.u32 %v306, 2147483648
    %v308 = vsel %vm225, %v307, %v306
    %v309 = vsub.s32 4, %v285
    %v310 = vsel %vm225, %v309, %v285
    %v311 = vsel %vm224, %v222, %v308
    %v312 = vsel %vm224, 0, %v310
    %v313 = vcosq.f32.pop %v311
    %v314 = vsinq.f32.pop %v311
    %vm315 = vweird.f32 %v222
    %v316 = vadd.s32 %v312, 3
    %v317 = vand.u32 %v316, 3
    %vm318 = vcmp.lt.s32.totalorder %v317, 2
    %vm319 = vcmp.eq.s32.totalorder %v317, 0
    %v320 = vxor.u32 %v314, 2147483648
    %v321 = vsel %vm319, %v313, %v320
    %vm322 = vcmp.eq.s32.totalorder %v317, 2
    %v323 = vxor.u32 %v313, 2147483648
    %v324 = vsel %vm322, %v323, %v314
    %v325 = vsel %vm318, %v321, %v324
    %v326 = vsel %vm315, nan, %v325
    %v327 = vmul.f32 %v221, %v326
    %v328 = vmul.f32 %v221, %v221
    %v329 = vand.u32 2147483647, %v222
    %vm330 = vcmp.le.f32.partialorder %v329, 0.7853982
    %vm331 = vcmp.lt.s32.totalorder %v222, 0
    %v332 = vand.u32 %v222, 2139095040
    %v333 = vshrl.u32 %v332, 23
    %v334 = vsub.s32 %v333, 127
    %v335 = vand.u32 2147483647, %v222
    %v336 = vand.u32 %v335, 8388607
    %v337 = vor.u32 %v336, 8388608
    %v338 = vsub.s32 0, %v337
    %v339 = vadd.s32 %v334, 1
    %vm340 = vcmp.gt.s32.totalorder %v339, 0
    %v341 = vsel %vm340, %v339, 0
    %v342 = vshrl.u32 %v341, 5
    %v343 = vand.u32 %v341, 31
    %v344 = vsub.s32 32, %v343
    %v345 = vshrl.u32 683565275, %v344
    %v346 = vshll.u32 683565275, %v343
    %v347 = vshrl.u32 2475754826, %v344
    %v348 = vor.u32 %v346, %v347
    %v349 = vshll.u32 2475754826, %v343
    %v350 = vshrl.u32 2131351028, %v344
    %v351 = vor.u32 %v349, %v350
    %v352 = vshll.u32 2131351028, %v343
    %v353 = vshrl.u32 2102212464, %v344
    %v354 = vor.u32 %v352, %v353
    %v355 = vshll.u32 2102212464, %v343
    %v356 = vshrl.u32 920167782, %v344
    %v357 = vor.u32 %v355, %v356
    %v358 = vshll.u32 920167782, %v343
    %v359 = vshrl.u32 1326507024, %v344
    %v360 = vor.u32 %v358, %v359
    %vm361 = vcmp.lt.s32.totalorder %v342, 1
    %vm362 = vcmp.lt.s32.totalorder %v342, 2
    %vm363 = vcmp.lt.s32.totalorder %v342, 3
    %vm364 = vcmp.lt.s32.totalorder %v342, 4
    %v365 = vsel %vm361, %v345, %v348
    %v366 = vsel %vm364, %v354, 2102212464
    %v367 = vsel %vm363, %v351, %v366
    %v368 = vsel %vm362, %v365, %v367
    %v369 = vsel %vm361, %v348, %v351
    %v370 = vsel %vm364, %v357, 920167782
    %v371 = vsel %vm363, %v354, %v370
    %v372 = vsel %vm362, %v369, %v371
    %v373 = vsel %vm361, %v351, %v354
    %v374 = vsel %vm364, %v360, 1326507024
    %v375 = vsel %vm363, %v357, %v374
    %v376 = vsel %vm362, %v373, %v375
    %v377 = vshll.u32 %v337, 8
    %v378 = vmul.u32.u64.compose %v377, %v376
    %v379 = vextract.low.u32 %v378
    %v380 = vextract.high.u32 %v378
    %v381 = vmul.u32.u64.compose %v377, %v372
    %v382 = vextract.low.u32 %v381
    %v383 = vextract.high.u32 %v381
    %v384 = vmul.u32 %v377, %v368
    %v385 = vadd.s32 %v380, %v382
    %vm386 = vc.u32 %v380, %v382
    %v387 = vadd.s32 %v383, 1
    %v388 = vsel %vm386, %v387, %v383
    %v389 = vadd.s32 %v384, %v388
    %v390 = vadd.s32 %v389, 536870912
    %v391 = vshrl.u32 %v390, 30
    %v392 = vshll.u32 %v391, 30
    %v393 = vsub.s32 %v389, %v392
    %vm394 = vcmp.lt.s32.totalorder %v393, 0
    %v395 = vsub.s32 0, %v393
    %v396 = vsel %vm394, %v395, %v393
    %v397 = vclz %v396
    %v398 = vsub.s32 %v397, 2
    %vm399 = vcmp.gt.s32.totalorder 0, %v398
    %v400 = vsel %vm399, 0, %v398
    %v401 = vsub.s32 32, %v400
    %v402 = vshll.u32 %v393, %v400
    %v403 = vshrl.u32 %v385, %v401
    %v404 = vor.u32 %v402, %v403
    %v405 = vsub.s32 4294967266, %v400
    %v406 = vadd.s32 %v405, 127
    %v407 = vshll.u32 %v406, 23
    %v408 = vor.u32 4788187, %v407
    %v409 = vand.u32 2147483647, %v408
    %v411 = vcvt.s32.f32 %v404
    %v412 = vmul.f32 %v411, %v409
    %v413 = vxor.u32 %v412, 2147483648
    %v414 = vsel %vm331, %v413, %v412
    %v415 = vsub.s32 4, %v391
    %v416 = vsel %vm331, %v415, %v391
    %v417 = vsel %vm330, %v222, %v414
    %v418 = vsel %vm330, 0, %v416
    %v419 = vcosq.f32.pop %v417
    %v420 = vsinq.f32.pop %v417
    %vm421 = vweird.f32 %v222
    %v422 = vand.u32 %v418, 3
    %vm423 = vcmp.lt.s32.totalorder %v422, 2
    %vm424 = vcmp.eq.s32.totalorder %v422, 0
    %v425 = vxor.u32 %v420, 2147483648
    %v426 = vsel %vm424, %v419, %v425
    %vm427 = vcmp.eq.s32.totalorder %v422, 2
    %v428 = vxor.u32 %v419, 2147483648
    %v429 = vsel %vm427, %v428, %v420
    %v430 = vsel %vm423, %v426, %v429
    %v431 = vsel %vm421, nan, %v430
    %v432 = vsub.f32 1.0, %v431
    %v433 = vmul.f32 %v328, %v432
    %v434 = vmul.f32 %v327, %v208
    %v435 = vmul.f32 %v327, %v211
    %v436 = vmul.f32 %v327, %v214
    %v437 = vmul.f32 %v433, %v208
    %v438 = vmul.f32 %v437, %v211
    %v439 = vmul.f32 %v437, %v214
    %v440 = vmul.f32 %v433, %v211
    %v441 = vmul.f32 %v440, %v214
    %v442 = vmul.f32 %v433, %v219
    %v443 = vsub.f32 1.0, %v442
    %v444 = vmul.f32 %v433, %v215
    %v445 = vadd.f32 %v443, %v444
    %v446 = vsub.f32 %v438, %v436
    %v447 = vadd.f32 %v439, %v435
    %v448 = vadd.f32 %v438, %v436
    %v449 = vmul.f32 %v433, %v216
    %v450 = vadd.f32 %v443, %v449
    %v451 = vsub.f32 %v441, %v434
    %v452 = vsub.f32 %v439, %v435
    %v453 = vadd.f32 %v441, %v434
    %v454 = vmul.f32 %v433, %v217
    %v455 = vadd.f32 %v443, %v454
    %456 = vst [vmem:[#allocation5] sm:$0x1] %v445
    %s457 = scalar_lea.vmem [#allocation5], 1
    %458 = vst [vmem:[%s457] sm:$0x1] %v446
    %s459 = scalar_lea.vmem [#allocation5], 2
    %460 = vst [vmem:[%s459] sm:$0x1] %v447
    %s461 = scalar_lea.vmem [#allocation5], 3
    %462 = vst [vmem:[%s461] sm:$0x1] %v199
    %s463 = scalar_lea.vmem [#allocation5], 4
    %464 = vst [vmem:[%s463] sm:$0x1] %v448
    %s465 = scalar_lea.vmem [#allocation5], 5
    %466 = vst [vmem:[%s465] sm:$0x1] %v450
    %s467 = scalar_lea.vmem [#allocation5], 6
    %468 = vst [vmem:[%s467] sm:$0x1] %v451
    %s469 = scalar_lea.vmem [#allocation5], 7
    %470 = vst [vmem:[%s469] sm:$0x1] %v202
    %s471 = scalar_lea.vmem [#allocation5], 8
    %472 = vst [vmem:[%s471] sm:$0x1] %v452
    %s473 = scalar_lea.vmem [#allocation5], 9
    %474 = vst [vmem:[%s473] sm:$0x1] %v453
    %s475 = scalar_lea.vmem [#allocation5], 10
    %476 = vst [vmem:[%s475] sm:$0x1] %v455
    %s477 = scalar_lea.vmem [#allocation5], 11
    %478 = vst [vmem:[%s477] sm:$0x1] %v205
    // Predicated region
    $region14: #{_camera_correction.1} parent=1 // pred_check
      _
    $region15: #{_camera_correction.1} parent=1 // pred_check_branch
      %480 = sbr.rel (0) target = $region17
    $region16: #{_camera_correction.1} parent=1 // pred_region
      %s482 = ssub.s32 192, 192
      %483 = vsyncadd [#allocation3], %s482
      %s484 = sshll.u32 [#allocation5], 4
      %s485 = int_to_ptr.vmem [resolvable:$true] %s484
      %490 = dma.vmem_to_hbm [thread:$0]  %s485, 192, %s2, [#allocation3], 16, 16, 1
    $region17: #{_camera_correction.1} parent=1 // pred_fallthru
      _
    // Predicated region
    $region18: #{_camera_correction.1} parent=1 // pred_check
      _
    $region19: #{_camera_correction.1} parent=1 // pred_check_branch
      %492 = sbr.rel (0) target = $region21
    $region20: #{_camera_correction.1} parent=1 // pred_region
      %493 = dma.done [#allocation3], 192
    $region21: #{_camera_correction.1} parent=1 // pred_fallthru
      _
    %494 = vsyncpa [#allocation3], 1
    %495 = vsyncpa [#allocation4], 1

</llo_original>
